<compile_context>
chip_gen: v7x
topology: tpu7x:2x2x1
jax: 0.10.0
libtpu: 0.0.40
codegen_flags: <defaults>
</compile_context>

<pallas_src>
import math

import jax
import jax.numpy as jnp
from jax.experimental import pallas as pl
from jax.experimental.pallas import tpu as pltpu


def _round_up(x, m):
    return ((x + m - 1) // m) * m


# ------------------------------------------------------------------ kernels --
def _epilogue(di_ref, acc_ref, xi_ref, o_ref, w_ref=None):
    """Shared epilogue: identity term + left D^{-1/2}, (optional W), relu, L2 normalize."""
    # agg_i = d_i * ( (A @ fs)_i + fs_i )   with fs = D^{-1/2} feat  (identity of A_hat)
    agg = di_ref[...] * (acc_ref[...] + xi_ref[...].astype(jnp.float32))
    if w_ref is None:
        h = jnp.maximum(agg, 0.0)                              # X = fs @ W precomputed
    else:
        h = jnp.dot(agg.astype(w_ref.dtype), w_ref[...],
                    preferred_element_type=jnp.float32)
        h = jnp.maximum(h, 0.0)
    # F.normalize(dim=1, p=2): x / max(||x||, 1e-12)  via EUP rsqrt.
    sumsq = jnp.sum(h * h, axis=1, keepdims=True)
    inv_norm = jax.lax.rsqrt(jnp.maximum(sumsq, 1e-24))
    o_ref[...] = (h * inv_norm).astype(o_ref.dtype)
    # TODO(synk): training-mode dropout (RNG mask) not implemented; eval-mode identity.


def _gcn_kernel_pre(di_ref, a_ref, xk_ref, xi_ref, o_ref, acc_ref):
    """Re-associated path: X = (d*feat)@W precomputed; kernel does A @ X + epilogue."""
    k = pl.program_id(1)

    @pl.when(k == 0)
    def _():
        acc_ref[...] = jnp.zeros_like(acc_ref)

    acc_ref[...] += jnp.dot(a_ref[...], xk_ref[...],
                            preferred_element_type=jnp.float32)

    @pl.when(k == pl.num_programs(1) - 1)
    def _():
        _epilogue(di_ref, acc_ref, xi_ref, o_ref)


def _gcn_kernel_post(di_ref, a_ref, xk_ref, xi_ref, w_ref, o_ref, acc_ref):
    """Original-order path (Fo_pad > Fi_pad): A @ (d*feat), then W matmul in epilogue."""
    k = pl.program_id(1)

    @pl.when(k == 0)
    def _():
        acc_ref[...] = jnp.zeros_like(acc_ref)

    acc_ref[...] += jnp.dot(a_ref[...], xk_ref[...],
                            preferred_element_type=jnp.float32)

    @pl.when(k == pl.num_programs(1) - 1)
    def _():
        _epilogue(di_ref, acc_ref, xi_ref, o_ref, w_ref)


# ------------------------------------------------------------------ wrapper --
def _pad_cast(x, rows, cols, dtype):
    """Cast first (half-width pad write for bf16), pad only if needed."""
    x = x.astype(dtype)
    r, c = x.shape
    if (r, c) != (rows, cols):
        x = jnp.pad(x, ((0, rows - r), (0, cols - c)))
    return x


def gcn_sat_layer(feat, A, W, *, tm=512, tk=1024, compute_dtype=jnp.bfloat16):
    N, in_feat = feat.shape
    out_feat = W.shape[1]

    A = A.astype(jnp.float32)
    feat = feat.astype(jnp.float32)
    W = W.astype(jnp.float32)

    # D^{-1/2} of A_hat = A + I via plain XLA rowsum (fuses with the cast/pad pass over A).
    d = jax.lax.rsqrt(jnp.sum(A, axis=1) + 1.0)                # (N,)
    fs = d[:, None] * feat                                     # right D^{-1/2} folded in

    Fi = _round_up(in_feat, 128)
    Fo = _round_up(out_feat, 128)

    # Re-associate (feat @ W first) when it shrinks the N^2-scale stream / FLOPs.
    reassociate = Fo <= Fi
    if reassociate:
        X = fs @ W                                             # (N, out_feat), small XLA matmul
        Fc = Fo
    else:
        X = fs
        Fc = Fi

    # ---- tile / padding geometry -------------------------------------------
    Np0 = _round_up(N, 128)
    tm = min(tm, Np0)
    tk = min(tk, Np0)
    # Force the larger tile to be a multiple of the smaller, so Np only rounds up to
    # max(tm, tk) instead of lcm(tm, tk) (avoids the 300 -> 768 padding blowup).
    if tk >= tm:
        tk = (tk // tm) * tm
    else:
        tm = (tm // tk) * tk
    Np = _round_up(Np0, max(tm, tk))
    # v7x megacore: prefer >= 2 row tiles so both TensorCores get work.
    if Np // tm < 2 and Np >= 256:
        tm = Np // 2

    grid = (Np // tm, Np // tk)

    # Streamed operands in compute_dtype (bf16 halves HBM traffic; f32 accumulation kept).
    A_p = _pad_cast(A, Np, Np, compute_dtype)
    X_p = _pad_cast(X, Np, Fc, compute_dtype)
    d_p = jnp.pad(d, (0, Np - N)).reshape(Np, 1)               # f32, tiny

    cparams = pltpu.CompilerParams(
        dimension_semantics=("parallel", "arbitrary"))

    in_specs = [
        pl.BlockSpec((tm, 1), lambda i, k: (i, 0)),            # d_i (left D^{-1/2})
        pl.BlockSpec((tm, tk), lambda i, k: (i, k)),           # A tile (dominant stream)
        pl.BlockSpec((tk, Fc), lambda i, k: (k, 0)),           # X / scaled feat, k block
        pl.BlockSpec((tm, Fc), lambda i, k: (i, 0)),           # X / scaled feat, i block
    ]
    out_spec = pl.BlockSpec((tm, Fo), lambda i, k: (i, 0))
    scratch = [pltpu.VMEM((tm, Fc), jnp.float32)]

    if reassociate:
        out_p = pl.pallas_call(
            _gcn_kernel_pre,
            out_shape=jax.ShapeDtypeStruct((Np, Fo), jnp.float32),
            grid=grid,
            in_specs=in_specs,
            out_specs=out_spec,
            scratch_shapes=scratch,
            compiler_params=cparams,
        )(d_p, A_p, X_p, X_p)
    else:
        W_p = _pad_cast(W, Fi, Fo, compute_dtype)
        out_p = pl.pallas_call(
            _gcn_kernel_post,
            out_shape=jax.ShapeDtypeStruct((Np, Fo), jnp.float32),
            grid=grid,
            in_specs=in_specs + [pl.BlockSpec((Fi, Fo), lambda i, k: (0, 0))],
            out_specs=out_spec,
            scratch_shapes=scratch,
            compiler_params=cparams,
        )(d_p, A_p, X_p, X_p, W_p)

    return out_p[:N, :out_feat]


# ---------------------------------------------------------------- reference --
def _reference(feat, A, W):
    N = A.shape[0]
    A_hat = A + jnp.eye(N, dtype=A.dtype)
    d_inv_sqrt = 1.0 / jnp.sqrt(jnp.sum(A_hat, axis=1))
    A_norm = d_inv_sqrt[:, None] * A_hat * d_inv_sqrt[None, :]
    h = jnp.maximum(A_norm @ feat @ W, 0.0)
    norm = jnp.maximum(jnp.linalg.norm(h, axis=1, keepdims=True), 1e-12)
    return h / norm


def _xavier_uniform(key, in_feat, out_feat):
    bound = math.sqrt(6.0 / (in_feat + out_feat))
    return jax.random.uniform(key, (in_feat, out_feat), dtype=jnp.float32,
                              minval=-bound, maxval=bound)


if __name__ == "__main__":
    key = jax.random.PRNGKey(0)

    # --- case 1: small shapes, f32 compute path (tight tolerance, single-tile grid) ---
    k_a, k_f, k_w = jax.random.split(key, 3)
    N, in_feat, out_feat = 16, 32, 16
    A_raw = jax.random.uniform(k_a, (N, N), dtype=jnp.float32)
    A = (A_raw + A_raw.T) * 0.5
    A = A * (1.0 - jnp.eye(N, dtype=jnp.float32))
    feat = jax.random.normal(k_f, (N, in_feat), dtype=jnp.float32)
    W = _xavier_uniform(k_w, in_feat, out_feat)

    out = jax.block_until_ready(gcn_sat_layer(feat, A, W, compute_dtype=jnp.float32))
    ref = _reference(feat, A, W)
    assert out.shape == (N, out_feat)
    assert jnp.allclose(out, ref, atol=5e-5, rtol=5e-5), "mismatch vs reference (case 1)"

    # --- case 2: non-multiple N, multi-tile grid, default bf16 streamed operands ------
    k_a2, k_f2, k_w2 = jax.random.split(jax.random.PRNGKey(1), 3)
    N2, in2, out2 = 300, 64, 48
    A2 = jax.random.uniform(k_a2, (N2, N2), dtype=jnp.float32)
    A2 = A2 * (1.0 - jnp.eye(N2, dtype=jnp.float32))
    feat2 = jax.random.normal(k_f2, (N2, in2), dtype=jnp.float32)
    W2 = _xavier_uniform(k_w2, in2, out2)

    out2_v = jax.block_until_ready(gcn_sat_layer(feat2, A2, W2))
    ref2 = _reference(feat2, A2, W2)
    assert out2_v.shape == (N2, out2)
    assert jnp.allclose(out2_v, ref2, atol=2e-2, rtol=2e-2), "mismatch vs reference (case 2)"

    # --- case 3: out_feat > in_feat  ->  W matmul stays in the epilogue (post path) ---
    k_a3, k_f3, k_w3 = jax.random.split(jax.random.PRNGKey(2), 3)
    N3, in3, out3 = 200, 64, 200
    A3 = jax.random.uniform(k_a3, (N3, N3), dtype=jnp.float32)
    A3 = A3 * (1.0 - jnp.eye(N3, dtype=jnp.float32))
    feat3 = jax.random.normal(k_f3, (N3, in3), dtype=jnp.float32)
    W3 = _xavier_uniform(k_w3, in3, out3)

    out3_v = jax.block_until_ready(gcn_sat_layer(feat3, A3, W3, compute_dtype=jnp.float32))
    ref3 = _reference(feat3, A3, W3)
    assert out3_v.shape == (N3, out3)
    assert jnp.allclose(out3_v, ref3, atol=5e-5, rtol=5e-5), "mismatch vs reference (case 3)"

    print("KERNEL_OK")
</pallas_src>

<mosaic_0001>
module attributes {stable_mosaic.version = 11 : i64} {
  func.func @_gcn_kernel_pre(%arg0: i32, %arg1: i32, %arg2: memref<128x1xf32, #tpu.memory_space<vmem>>, %arg3: memref<128x128xf32, #tpu.memory_space<vmem>>, %arg4: memref<128x128xf32, #tpu.memory_space<vmem>>, %arg5: memref<128x128xf32, #tpu.memory_space<vmem>>, %arg6: memref<128x128xf32, #tpu.memory_space<vmem>>, %arg7: memref<128x128xf32, #tpu.memory_space<vmem>>) attributes {dimension_semantics = [#tpu.dimension_semantics<parallel>, #tpu.dimension_semantics<arbitrary>], iteration_bounds = array<i64: 1, 1>, scalar_prefetch = 0 : i64, scratch_operands = 1 : i64, tpu.core_type = #tpu.core_type<tc>, window_params = [{transform_indices = @transform_0, window_bounds = array<i64: 128, 1>}, {transform_indices = @transform_1, window_bounds = array<i64: 128, 128>}, {transform_indices = @transform_2, window_bounds = array<i64: 128, 128>}, {transform_indices = @transform_3, window_bounds = array<i64: 128, 128>}, {transform_indices = @transform_4, window_bounds = array<i64: 128, 128>}]} {
    %c0_i32 = arith.constant 0 : i32
    %0 = arith.cmpi eq, %arg1, %c0_i32 : i32
    %1 = arith.extui %0 : i1 to i32
    %c0_i32_0 = arith.constant 0 : i32
    %2 = arith.cmpi ne, %1, %c0_i32_0 : i32
    scf.if %2 {
      %cst_10 = arith.constant 0.000000e+00 : f32
      %12 = vector.broadcast %cst_10 : f32 to vector<128x128xf32>
      %c0_11 = arith.constant 0 : index
      %c0_12 = arith.constant 0 : index
      %13 = vector.load %arg7[%c0_11, %c0_12] : memref<128x128xf32, #tpu.memory_space<vmem>>, vector<128x128xf32>
      tpu.vector_store %arg7[%c0_11, %c0_12], %12 {strides = array<i32>} : memref<128x128xf32, #tpu.memory_space<vmem>>, vector<128x128xf32>,
    } else {
    }
    %c0 = arith.constant 0 : index
    %c0_1 = arith.constant 0 : index
    %3 = vector.load %arg7[%c0, %c0_1] : memref<128x128xf32, #tpu.memory_space<vmem>>, vector<128x128xf32>
    %c0_2 = arith.constant 0 : index
    %c0_3 = arith.constant 0 : index
    %4 = vector.load %arg3[%c0_2, %c0_3] : memref<128x128xf32, #tpu.memory_space<vmem>>, vector<128x128xf32>
    %c0_4 = arith.constant 0 : index
    %c0_5 = arith.constant 0 : index
    %5 = vector.load %arg4[%c0_4, %c0_5] : memref<128x128xf32, #tpu.memory_space<vmem>>, vector<128x128xf32>
    %cst = arith.constant dense<0.000000e+00> : vector<128x128xf32>
    %6 = tpu.matmul %4, %5, %cst {dimension_numbers = #tpu.dot_dimension_numbers<[1], [0], [0], [1], [0, 0, 1, 1], [], []>} : vector<128x128xf32>, vector<128x128xf32>, vector<128x128xf32> -> vector<128x128xf32>
    %7 = arith.addf %3, %6 : vector<128x128xf32>
    %c0_6 = arith.constant 0 : index
    %c0_7 = arith.constant 0 : index
    %8 = vector.load %arg7[%c0_6, %c0_7] : memref<128x128xf32, #tpu.memory_space<vmem>>, vector<128x128xf32>
    tpu.vector_store %arg7[%c0_6, %c0_7], %7 {strides = array<i32>} : memref<128x128xf32, #tpu.memory_space<vmem>>, vector<128x128xf32>,
    %c0_i32_8 = arith.constant 0 : i32
    %9 = arith.cmpi eq, %arg1, %c0_i32_8 : i32
    %10 = arith.extui %9 : i1 to i32
    %c0_i32_9 = arith.constant 0 : i32
    %11 = arith.cmpi ne, %10, %c0_i32_9 : i32
    scf.if %11 {
      %c0_10 = arith.constant 0 : index
      %c0_11 = arith.constant 0 : index
      %12 = vector.load %arg2[%c0_10, %c0_11] : memref<128x1xf32, #tpu.memory_space<vmem>>, vector<128x1xf32>
      %c0_12 = arith.constant 0 : index
      %c0_13 = arith.constant 0 : index
      %13 = vector.load %arg7[%c0_12, %c0_13] : memref<128x128xf32, #tpu.memory_space<vmem>>, vector<128x128xf32>
      %c0_14 = arith.constant 0 : index
      %c0_15 = arith.constant 0 : index
      %14 = vector.load %arg5[%c0_14, %c0_15] : memref<128x128xf32, #tpu.memory_space<vmem>>, vector<128x128xf32>
      %15 = arith.addf %13, %14 : vector<128x128xf32>
      %16 = vector.broadcast %12 : vector<128x1xf32> to vector<128x128xf32>
      %17 = arith.mulf %16, %15 : vector<128x128xf32>
      %cst_16 = arith.constant 0.000000e+00 : f32
      %18 = vector.broadcast %cst_16 : f32 to vector<128x128xf32>
      %19 = arith.maximumf %17, %18 : vector<128x128xf32>
      %20 = arith.mulf %19, %19 : vector<128x128xf32>
      %cst_17 = arith.constant dense<0.000000e+00> : vector<128xf32>
      %21 = vector.multi_reduction <add>, %20, %cst_17 [1] : vector<128x128xf32> to vector<128xf32>
      %22 = vector.shape_cast %21 : vector<128xf32> to vector<128x1xf32>
      %cst_18 = arith.constant 1.000000e-24 : f32
      %23 = vector.broadcast %cst_18 : f32 to vector<128x1xf32>
      %24 = arith.maximumf %22, %23 : vector<128x1xf32>
      %25 = math.rsqrt %24 : vector<128x1xf32>
      %26 = vector.broadcast %25 : vector<128x1xf32> to vector<128x128xf32>
      %27 = arith.mulf %19, %26 : vector<128x128xf32>
      %c0_19 = arith.constant 0 : index
      %c0_20 = arith.constant 0 : index
      %28 = vector.load %arg6[%c0_19, %c0_20] : memref<128x128xf32, #tpu.memory_space<vmem>>, vector<128x128xf32>
      tpu.vector_store %arg6[%c0_19, %c0_20], %27 {strides = array<i32>} : memref<128x128xf32, #tpu.memory_space<vmem>>, vector<128x128xf32>,
    } else {
    }
    return
  }
  func.func @transform_0(%arg0: i32, %arg1: i32) -> (i32, i32) {
    %c0_i32 = arith.constant 0 : i32
    %c0_i32_0 = arith.constant 0 : i32
    return %arg0, %c0_i32 : i32, i32
  }
  func.func @transform_1(%arg0: i32, %arg1: i32) -> (i32, i32) {
    %c0_i32 = arith.constant 0 : i32
    return %arg0, %arg1 : i32, i32
  }
  func.func @transform_2(%arg0: i32, %arg1: i32) -> (i32, i32) {
    %c0_i32 = arith.constant 0 : i32
    %c0_i32_0 = arith.constant 0 : i32
    return %arg1, %c0_i32 : i32, i32
  }
  func.func @transform_3(%arg0: i32, %arg1: i32) -> (i32, i32) {
    %c0_i32 = arith.constant 0 : i32
    %c0_i32_0 = arith.constant 0 : i32
    return %arg0, %c0_i32 : i32, i32
  }
  func.func @transform_4(%arg0: i32, %arg1: i32) -> (i32, i32) {
    %c0_i32 = arith.constant 0 : i32
    %c0_i32_0 = arith.constant 0 : i32
    return %arg0, %c0_i32 : i32, i32
  }
}

</mosaic_0001>

<llo_original>
// kernel: tpu_custom_call.1
$region0: #{tpu_custom_call.1}
  #allocation0 [shape = 'u32[]', space=smem, size = 0x4, offset = 0x4, fixed_abs, tag = 'smem constant byte address 0x4 - core index']
  #allocation1 [shape = 'u32[144,128]{1,0:T(1,128)}', space=vmem, size = 0x12000, scoped, tag = 'internal scratch']
  #allocation2 [shape = 'f32[128,128]{1,0:T(8,128)}', space=vmem, size = 0x10000, scoped, tag = 'scratch operand']
  %s0 = inlined_call_operand.vmem [shape: f32[128,1], index: 0, kind: input, shape index: {}]
  %s1 = inlined_call_operand.vmem [shape: f32[128,128], index: 1, kind: input, shape index: {}]
  %s2 = inlined_call_operand.hbm [shape: f32[128,128], index: 2, kind: input, shape index: {}]
  %s3 = inlined_call_operand.hbm [shape: f32[128,128], index: 3, kind: input, shape index: {}]
  %s4 = inlined_call_operand.hbm [shape: f32[128,128], index: 4, kind: output, shape index: {}]
  %s5 = sld [smem:[#allocation0]]
  $region42: #{tpu_custom_call.1} parent=0
    _
  %s7 = ssub.s32 1, %s5
  %s8 = scalar_select 0, %s7, %s5
  $region1: #{tpu_custom_call.1} parent=0
    #allocation3 [shape = 'u8[65536]{0}', space=vmem, size = 0x10000, scoped, tag = 'input window, operand 2, single buffered']
    #allocation4 [shape = 's32[1]{0}', space=sflag, size = 0x4, scoped, tag = 'scoped memory for tpu_custom_call.1']
    #allocation5 [shape = 's32[1]{0}', space=sflag, size = 0x4, scoped, tag = 'scoped memory for tpu_custom_call.1']
    #allocation6 [shape = 'u8[65536]{0}', space=vmem, size = 0x10000, scoped, tag = 'input window, operand 3, single buffered']
    #allocation7 [shape = 's32[1]{0}', space=sflag, size = 0x4, scoped, tag = 'scoped memory for tpu_custom_call.1']
    #allocation8 [shape = 'u8[65536]{0}', space=vmem, size = 0x10000, scoped, tag = 'output window, operand 0, single buffered']
    %9 = vsyncpa [#allocation4], 0
    %10 = vsyncpa [#allocation7], 0
    %11 = vsyncpa [#allocation5], 0
    // Predicated region
    $region2: #{tpu_custom_call.1} parent=1 // pred_check
      _
    $region3: #{tpu_custom_call.1} parent=1 // pred_check_branch
      %13 = sbr.rel (0) target = $region5
    $region4: #{tpu_custom_call.1} parent=1 // pred_region
      _
    $region5: #{tpu_custom_call.1} parent=1 // pred_fallthru
      _
    // Predicated region
    $region6: #{tpu_custom_call.1} parent=1 // pred_check
      _
    $region7: #{tpu_custom_call.1} parent=1 // pred_check_branch
      %15 = sbr.rel (0) target = $region9
    $region8: #{tpu_custom_call.1} parent=1 // pred_region
      _
    $region9: #{tpu_custom_call.1} parent=1 // pred_fallthru
      _
    // Predicated region
    $region10: #{tpu_custom_call.1} parent=1 // pred_check
      _
    $region11: #{tpu_custom_call.1} parent=1 // pred_check_branch
      %17 = sbr.rel (0) target = $region13
    $region12: #{tpu_custom_call.1} parent=1 // pred_region
      %s19 = ssub.s32 2048, 2048
      %20 = vsyncadd [#allocation4], %s19
      %s21 = sshll.u32 [#allocation3], 4
      %s22 = int_to_ptr.vmem [resolvable:$true] %s21
      %27 = dma.hbm_to_vmem [thread:$0]  %s2, 2048, %s22, [#allocation4], 128, 128, 8
    $region13: #{tpu_custom_call.1} parent=1 // pred_fallthru
      _
    // Predicated region
    $region14: #{tpu_custom_call.1} parent=1 // pred_check
      _
    $region15: #{tpu_custom_call.1} parent=1 // pred_check_branch
      %29 = sbr.rel (0) target = $region17
    $region16: #{tpu_custom_call.1} parent=1 // pred_region
      %s31 = ssub.s32 2048, 2048
      %32 = vsyncadd [#allocation7], %s31
      %s33 = sshll.u32 [#allocation6], 4
      %s34 = int_to_ptr.vmem [resolvable:$true] %s33
      %39 = dma.hbm_to_vmem [thread:$0]  %s3, 2048, %s34, [#allocation7], 128, 128, 8
    $region17: #{tpu_custom_call.1} parent=1 // pred_fallthru
      _
    // Predicated region
    $region18: #{tpu_custom_call.1} parent=1 // pred_check
      _
    $region19: #{tpu_custom_call.1} parent=1 // pred_check_branch
      %41 = sbr.rel (0) target = $region21
    $region20: #{tpu_custom_call.1} parent=1 // pred_region
      %42 = dma.done [#allocation4], 2048
    $region21: #{tpu_custom_call.1} parent=1 // pred_fallthru
      _
    // Predicated region
    $region22: #{tpu_custom_call.1} parent=1 // pred_check
      _
    $region23: #{tpu_custom_call.1} parent=1 // pred_check_branch
      %44 = sbr.rel (0) target = $region25
    $region24: #{tpu_custom_call.1} parent=1 // pred_region
      %45 = dma.done [#allocation7], 2048
    $region25: #{tpu_custom_call.1} parent=1 // pred_fallthru
      _
    %p46 = scmp.eq.s32.totalorder 0, 0
    // Predicated region
    $region26: #{tpu_custom_call.1} parent=1 // pred_check
      %p47 = pneg %p46
    $region27: #{tpu_custom_call.1} parent=1 // pred_check_branch
      %49 = sbr.rel (%p47) target = $region29
    $region28: #{tpu_custom_call.1} parent=1 // pred_region
      %50 = vst [vmem:[#allocation2] sm:$0xff] 0.0
      %51 = vst [vmem:[#allocation2 + $0x8] sm:$0xff] 0.0
      %52 = vst [vmem:[#allocation2 + $0x10] sm:$0xff] 0.0
      %53 = vst [vmem:[#allocation2 + $0x18] sm:$0xff] 0.0
      %54 = vst [vmem:[#allocation2 + $0x20] sm:$0xff] 0.0
      %55 = vst [vmem:[#allocation2 + $0x28] sm:$0xff] 0.0
      %56 = vst [vmem:[#allocation2 + $0x30] sm:$0xff] 0.0
      %57 = vst [vmem:[#allocation2 + $0x38] sm:$0xff] 0.0
      %58 = vst [vmem:[#allocation2 + $0x40] sm:$0xff] 0.0
      %59 = vst [vmem:[#allocation2 + $0x48] sm:$0xff] 0.0
      %60 = vst [vmem:[#allocation2 + $0x50] sm:$0xff] 0.0
      %61 = vst [vmem:[#allocation2 + $0x58] sm:$0xff] 0.0
      %62 = vst [vmem:[#allocation2 + $0x60] sm:$0xff] 0.0
      %63 = vst [vmem:[#allocation2 + $0x68] sm:$0xff] 0.0
      %64 = vst [vmem:[#allocation2 + $0x70] sm:$0xff] 0.0
      %65 = vst [vmem:[#allocation2 + $0x78] sm:$0xff] 0.0
    $region29: #{tpu_custom_call.1} parent=1 // pred_fallthru
      _
    %v66 = vld [vmem:[#allocation2] sm:$0xff]
    %v67 = vld [vmem:[#allocation2 + $0x8] sm:$0xff]
    %v68 = vld [vmem:[#allocation2 + $0x10] sm:$0xff]
    %v69 = vld [vmem:[#allocation2 + $0x18] sm:$0xff]
    %v70 = vld [vmem:[#allocation2 + $0x20] sm:$0xff]
    %v71 = vld [vmem:[#allocation2 + $0x28] sm:$0xff]
    %v72 = vld [vmem:[#allocation2 + $0x30] sm:$0xff]
    %v73 = vld [vmem:[#allocation2 + $0x38] sm:$0xff]
    %v74 = vld [vmem:[#allocation2 + $0x40] sm:$0xff]
    %v75 = vld [vmem:[#allocation2 + $0x48] sm:$0xff]
    %v76 = vld [vmem:[#allocation2 + $0x50] sm:$0xff]
    %v77 = vld [vmem:[#allocation2 + $0x58] sm:$0xff]
    %v78 = vld [vmem:[#allocation2 + $0x60] sm:$0xff]
    %v79 = vld [vmem:[#allocation2 + $0x68] sm:$0xff]
    %v80 = vld [vmem:[#allocation2 + $0x70] sm:$0xff]
    %v81 = vld [vmem:[#allocation2 + $0x78] sm:$0xff]
    %v82 = vld [vmem:[%s1] sm:$0xff]
    %v83 = vld [vmem:[%s1 + $0x8] sm:$0xff]
    %v84 = vld [vmem:[%s1 + $0x10] sm:$0xff]
    %v85 = vld [vmem:[%s1 + $0x18] sm:$0xff]
    %v86 = vld [vmem:[%s1 + $0x20] sm:$0xff]
    %v87 = vld [vmem:[%s1 + $0x28] sm:$0xff]
    %v88 = vld [vmem:[%s1 + $0x30] sm:$0xff]
    %v89 = vld [vmem:[%s1 + $0x38] sm:$0xff]
    %v90 = vld [vmem:[%s1 + $0x40] sm:$0xff]
    %v91 = vld [vmem:[%s1 + $0x48] sm:$0xff]
    %v92 = vld [vmem:[%s1 + $0x50] sm:$0xff]
    %v93 = vld [vmem:[%s1 + $0x58] sm:$0xff]
    %v94 = vld [vmem:[%s1 + $0x60] sm:$0xff]
    %v95 = vld [vmem:[%s1 + $0x68] sm:$0xff]
    %v96 = vld [vmem:[%s1 + $0x70] sm:$0xff]
    %v97 = vld [vmem:[%s1 + $0x78] sm:$0xff]
    %v98 = vld [vmem:[#allocation3] sm:$0xff]
    %v99 = vld [vmem:[#allocation3 + $0x8] sm:$0xff]
    %v100 = vld [vmem:[#allocation3 + $0x10] sm:$0xff]
    %v101 = vld [vmem:[#allocation3 + $0x18] sm:$0xff]
    %v102 = vld [vmem:[#allocation3 + $0x20] sm:$0xff]
    %v103 = vld [vmem:[#allocation3 + $0x28] sm:$0xff]
    %v104 = vld [vmem:[#allocation3 + $0x30] sm:$0xff]
    %v105 = vld [vmem:[#allocation3 + $0x38] sm:$0xff]
    %v106 = vld [vmem:[#allocation3 + $0x40] sm:$0xff]
    %v107 = vld [vmem:[#allocation3 + $0x48] sm:$0xff]
    %v108 = vld [vmem:[#allocation3 + $0x50] sm:$0xff]
    %v109 = vld [vmem:[#allocation3 + $0x58] sm:$0xff]
    %v110 = vld [vmem:[#allocation3 + $0x60] sm:$0xff]
    %v111 = vld [vmem:[#allocation3 + $0x68] sm:$0xff]
    %v112 = vld [vmem:[#allocation3 + $0x70] sm:$0xff]
    %v113 = vld [vmem:[#allocation3 + $0x78] sm:$0xff]
    %114 = vmatprep.subr.mxu0 0.0
    %115 = vmatpush1.msra.mxu0 %v98
    %116 = vmatprep.subr.mxu0 0.0
    %117 = vmatpush1.msra.mxu0 %v99
    %118 = vmatprep.subr.mxu0 0.0
    %119 = vmatpush1.msra.mxu0 %v100
    %120 = vmatprep.subr.mxu0 0.0
    %121 = vmatpush1.msra.mxu0 %v101
    %122 = vmatprep.subr.mxu0 0.0
    %123 = vmatpush1.msra.mxu0 %v102
    %124 = vmatprep.subr.mxu0 0.0
    %125 = vmatpush1.msra.mxu0 %v103
    %126 = vmatprep.subr.mxu0 0.0
    %127 = vmatpush1.msra.mxu0 %v104
    %128 = vmatprep.subr.mxu0 0.0
    %129 = vmatpush1.msra.mxu0 %v105
    %130 = vmatprep.subr.mxu0 0.0
    %131 = vmatpush1.msra.mxu0 %v106
    %132 = vmatprep.subr.mxu0 0.0
    %133 = vmatpush1.msra.mxu0 %v107
    %134 = vmatprep.subr.mxu0 0.0
    %135 = vmatpush1.msra.mxu0 %v108
    %136 = vmatprep.subr.mxu0 0.0
    %137 = vmatpush1.msra.mxu0 %v109
    %138 = vmatprep.subr.mxu0 0.0
    %139 = vmatpush1.msra.mxu0 %v110
    %140 = vmatprep.subr.mxu0 0.0
    %141 = vmatpush1.msra.mxu0 %v111
    %142 = vmatprep.subr.mxu0 0.0
    %143 = vmatpush1.msra.mxu0 %v112
    %144 = vmatprep.subr.mxu0 0.0
    %145 = vmatpush1.msra.mxu0 %v113
    %146 = vmatprep.subr.mxu0 0.0
    %147 = vmatpush1.msra.mxu0 0.0
    %148 = vmatprep.subr.mxu0 0.0
    %149 = vmatpush1.msra.mxu0 0.0
    %150 = vmatprep.subr.mxu0 0.0
    %151 = vmatpush1.msra.mxu0 0.0
    %152 = vmatprep.subr.mxu0 0.0
    %153 = vmatpush1.msra.mxu0 0.0
    %154 = vmatprep.subr.mxu0 0.0
    %155 = vmatpush1.msra.mxu0 0.0
    %156 = vmatprep.subr.mxu0 0.0
    %157 = vmatpush1.msra.mxu0 0.0
    %158 = vmatprep.subr.mxu0 0.0
    %159 = vmatpush1.msra.mxu0 0.0
    %160 = vmatprep.subr.mxu0 0.0
    %161 = vmatpush1.msra.mxu0 0.0
    %162 = vmatprep.subr.mxu0 0.0
    %163 = vmatpush1.msra.mxu0 0.0
    %164 = vmatprep.subr.mxu0 0.0
    %165 = vmatpush1.msra.mxu0 0.0
    %166 = vmatprep.subr.mxu0 0.0
    %167 = vmatpush1.msra.mxu0 0.0
    %168 = vmatprep.subr.mxu0 0.0
    %169 = vmatpush1.msra.mxu0 0.0
    %170 = vmatprep.subr.mxu0 0.0
    %171 = vmatpush1.msra.mxu0 0.0
    %172 = vmatprep.subr.mxu0 0.0
    %173 = vmatpush1.msra.mxu0 0.0
    %174 = vmatprep.subr.mxu0 0.0
    %175 = vmatpush1.msra.mxu0 0.0
    %176 = vmatprep.subr.mxu0 0.0
    %177 = vmatpush1.msra.mxu0 0.0
    %178 = vmatprep.mubr.f32.mxu0 0.0
    %179 = vmatmul.mubr.f32.gmra.mrb[0].mxu0 %v82
    %v180 = vpop.f32.mrb[0].mxu0
    %v181 = vadd.f32 0.0, %v180
    %v182 = vpop.f32.mrb[0].mxu0
    %183 = vmatprep.mubr.f32.mxu0 0.0
    %184 = vmatmul.mubr.f32.gmra.mrb[0].mxu0 %v83
    %v185 = vpop.f32.mrb[0].mxu0
    %v186 = vadd.f32 0.0, %v185
    %v187 = vpop.f32.mrb[0].mxu0
    %188 = vmatprep.mubr.f32.mxu0 0.0
    %189 = vmatmul.mubr.f32.gmra.mrb[0].mxu0 %v84
    %v190 = vpop.f32.mrb[0].mxu0
    %v191 = vadd.f32 0.0, %v190
    %v192 = vpop.f32.mrb[0].mxu0
    %193 = vmatprep.mubr.f32.mxu0 0.0
    %194 = vmatmul.mubr.f32.gmra.mrb[0].mxu0 %v85
    %v195 = vpop.f32.mrb[0].mxu0
    %v196 = vadd.f32 0.0, %v195
    %v197 = vpop.f32.mrb[0].mxu0
    %198 = vmatprep.mubr.f32.mxu0 0.0
    %199 = vmatmul.mubr.f32.gmra.mrb[0].mxu0 %v86
    %v200 = vpop.f32.mrb[0].mxu0
    %v201 = vadd.f32 0.0, %v200
    %v202 = vpop.f32.mrb[0].mxu0
    %203 = vmatprep.mubr.f32.mxu0 0.0
    %204 = vmatmul.mubr.f32.gmra.mrb[0].mxu0 %v87
    %v205 = vpop.f32.mrb[0].mxu0
    %v206 = vadd.f32 0.0, %v205
    %v207 = vpop.f32.mrb[0].mxu0
    %208 = vmatprep.mubr.f32.mxu0 0.0
    %209 = vmatmul.mubr.f32.gmra.mrb[0].mxu0 %v88
    %v210 = vpop.f32.mrb[0].mxu0
    %v211 = vadd.f32 0.0, %v210
    %v212 = vpop.f32.mrb[0].mxu0
    %213 = vmatprep.mubr.f32.mxu0 0.0
    %214 = vmatmul.mubr.f32.gmra.mrb[0].mxu0 %v89
    %v215 = vpop.f32.mrb[0].mxu0
    %v216 = vadd.f32 0.0, %v215
    %v217 = vpop.f32.mrb[0].mxu0
    %218 = vmatprep.mubr.f32.mxu0 0.0
    %219 = vmatmul.mubr.f32.gmra.mrb[0].mxu0 %v90
    %v220 = vpop.f32.mrb[0].mxu0
    %v221 = vadd.f32 0.0, %v220
    %v222 = vpop.f32.mrb[0].mxu0
    %223 = vmatprep.mubr.f32.mxu0 0.0
    %224 = vmatmul.mubr.f32.gmra.mrb[0].mxu0 %v91
    %v225 = vpop.f32.mrb[0].mxu0
    %v226 = vadd.f32 0.0, %v225
    %v227 = vpop.f32.mrb[0].mxu0
    %228 = vmatprep.mubr.f32.mxu0 0.0
    %229 = vmatmul.mubr.f32.gmra.mrb[0].mxu0 %v92
    %v230 = vpop.f32.mrb[0].mxu0
    %v231 = vadd.f32 0.0, %v230
    %v232 = vpop.f32.mrb[0].mxu0
    %233 = vmatprep.mubr.f32.mxu0 0.0
    %234 = vmatmul.mubr.f32.gmra.mrb[0].mxu0 %v93
    %v235 = vpop.f32.mrb[0].mxu0
    %v236 = vadd.f32 0.0, %v235
    %v237 = vpop.f32.mrb[0].mxu0
    %238 = vmatprep.mubr.f32.mxu0 0.0
    %239 = vmatmul.mubr.f32.gmra.mrb[0].mxu0 %v94
    %v240 = vpop.f32.mrb[0].mxu0
    %v241 = vadd.f32 0.0, %v240
    %v242 = vpop.f32.mrb[0].mxu0
    %243 = vmatprep.mubr.f32.mxu0 0.0
    %244 = vmatmul.mubr.f32.gmra.mrb[0].mxu0 %v95
    %v245 = vpop.f32.mrb[0].mxu0
    %v246 = vadd.f32 0.0, %v245
    %v247 = vpop.f32.mrb[0].mxu0
    %248 = vmatprep.mubr.f32.mxu0 0.0
    %249 = vmatmul.mubr.f32.gmra.mrb[0].mxu0 %v96
    %v250 = vpop.f32.mrb[0].mxu0
    %v251 = vadd.f32 0.0, %v250
    %v252 = vpop.f32.mrb[0].mxu0
    %253 = vmatprep.mubr.f32.mxu0 0.0
    %254 = vmatmul.mubr.f32.gmra.mrb[0].mxu0 %v97
    %v255 = vpop.f32.mrb[0].mxu0
    %v256 = vadd.f32 0.0, %v255
    %v257 = vpop.f32.mrb[0].mxu0
    %258 = vdwg.mxu0
    %v259 = vadd.f32 %v66, %v181
    %v260 = vadd.f32 %v67, %v186
    %v261 = vadd.f32 %v68, %v191
    %v262 = vadd.f32 %v69, %v196
    %v263 = vadd.f32 %v70, %v201
    %v264 = vadd.f32 %v71, %v206
    %v265 = vadd.f32 %v72, %v211
    %v266 = vadd.f32 %v73, %v216
    %v267 = vadd.f32 %v74, %v221
    %v268 = vadd.f32 %v75, %v226
    %v269 = vadd.f32 %v76, %v231
    %v270 = vadd.f32 %v77, %v236
    %v271 = vadd.f32 %v78, %v241
    %v272 = vadd.f32 %v79, %v246
    %v273 = vadd.f32 %v80, %v251
    %v274 = vadd.f32 %v81, %v256
    %275 = vst [vmem:[#allocation2] sm:$0xff] %v259
    %276 = vst [vmem:[#allocation2 + $0x8] sm:$0xff] %v260
    %277 = vst [vmem:[#allocation2 + $0x10] sm:$0xff] %v261
    %278 = vst [vmem:[#allocation2 + $0x18] sm:$0xff] %v262
    %279 = vst [vmem:[#allocation2 + $0x20] sm:$0xff] %v263
    %280 = vst [vmem:[#allocation2 + $0x28] sm:$0xff] %v264
    %281 = vst [vmem:[#allocation2 + $0x30] sm:$0xff] %v265
    %282 = vst [vmem:[#allocation2 + $0x38] sm:$0xff] %v266
    %283 = vst [vmem:[#allocation2 + $0x40] sm:$0xff] %v267
    %284 = vst [vmem:[#allocation2 + $0x48] sm:$0xff] %v268
    %285 = vst [vmem:[#allocation2 + $0x50] sm:$0xff] %v269
    %286 = vst [vmem:[#allocation2 + $0x58] sm:$0xff] %v270
    %287 = vst [vmem:[#allocation2 + $0x60] sm:$0xff] %v271
    %288 = vst [vmem:[#allocation2 + $0x68] sm:$0xff] %v272
    %289 = vst [vmem:[#allocation2 + $0x70] sm:$0xff] %v273
    %290 = vst [vmem:[#allocation2 + $0x78] sm:$0xff] %v274
    // Predicated region
    $region30: #{tpu_custom_call.1} parent=1 // pred_check
      %p291 = pneg %p46
    $region31: #{tpu_custom_call.1} parent=1 // pred_check_branch
      %293 = sbr.rel (%p291) target = $region33
    $region32: #{tpu_custom_call.1} parent=1 // pred_region
      %v294 = vld [vmem:[%s0] sm:$0xff]
      %v295 = vld [vmem:[%s0 + $0x8] sm:$0xff]
      %v296 = vld [vmem:[%s0 + $0x10] sm:$0xff]
      %v297 = vld [vmem:[%s0 + $0x18] sm:$0xff]
      %v298 = vld [vmem:[%s0 + $0x20] sm:$0xff]
      %v299 = vld [vmem:[%s0 + $0x28] sm:$0xff]
      %v300 = vld [vmem:[%s0 + $0x30] sm:$0xff]
      %v301 = vld [vmem:[%s0 + $0x38] sm:$0xff]
      %v302 = vld [vmem:[%s0 + $0x40] sm:$0xff]
      %v303 = vld [vmem:[%s0 + $0x48] sm:$0xff]
      %v304 = vld [vmem:[%s0 + $0x50] sm:$0xff]
      %v305 = vld [vmem:[%s0 + $0x58] sm:$0xff]
      %v306 = vld [vmem:[%s0 + $0x60] sm:$0xff]
      %v307 = vld [vmem:[%s0 + $0x68] sm:$0xff]
      %v308 = vld [vmem:[%s0 + $0x70] sm:$0xff]
      %v309 = vld [vmem:[%s0 + $0x78] sm:$0xff]
      %v310 = vld [vmem:[#allocation2] sm:$0xff]
      %v311 = vld [vmem:[#allocation2 + $0x8] sm:$0xff]
      %v312 = vld [vmem:[#allocation2 + $0x10] sm:$0xff]
      %v313 = vld [vmem:[#allocation2 + $0x18] sm:$0xff]
      %v314 = vld [vmem:[#allocation2 + $0x20] sm:$0xff]
      %v315 = vld [vmem:[#allocation2 + $0x28] sm:$0xff]
      %v316 = vld [vmem:[#allocation2 + $0x30] sm:$0xff]
      %v317 = vld [vmem:[#allocation2 + $0x38] sm:$0xff]
      %v318 = vld [vmem:[#allocation2 + $0x40] sm:$0xff]
      %v319 = vld [vmem:[#allocation2 + $0x48] sm:$0xff]
      %v320 = vld [vmem:[#allocation2 + $0x50] sm:$0xff]
      %v321 = vld [vmem:[#allocation2 + $0x58] sm:$0xff]
      %v322 = vld [vmem:[#allocation2 + $0x60] sm:$0xff]
      %v323 = vld [vmem:[#allocation2 + $0x68] sm:$0xff]
      %v324 = vld [vmem:[#allocation2 + $0x70] sm:$0xff]
      %v325 = vld [vmem:[#allocation2 + $0x78] sm:$0xff]
      %v326 = vld [vmem:[#allocation6] sm:$0xff]
      %v327 = vld [vmem:[#allocation6 + $0x8] sm:$0xff]
      %v328 = vld [vmem:[#allocation6 + $0x10] sm:$0xff]
      %v329 = vld [vmem:[#allocation6 + $0x18] sm:$0xff]
      %v330 = vld [vmem:[#allocation6 + $0x20] sm:$0xff]
      %v331 = vld [vmem:[#allocation6 + $0x28] sm:$0xff]
      %v332 = vld [vmem:[#allocation6 + $0x30] sm:$0xff]
      %v333 = vld [vmem:[#allocation6 + $0x38] sm:$0xff]
      %v334 = vld [vmem:[#allocation6 + $0x40] sm:$0xff]
      %v335 = vld [vmem:[#allocation6 + $0x48] sm:$0xff]
      %v336 = vld [vmem:[#allocation6 + $0x50] sm:$0xff]
      %v337 = vld [vmem:[#allocation6 + $0x58] sm:$0xff]
      %v338 = vld [vmem:[#allocation6 + $0x60] sm:$0xff]
      %v339 = vld [vmem:[#allocation6 + $0x68] sm:$0xff]
      %v340 = vld [vmem:[#allocation6 + $0x70] sm:$0xff]
      %v341 = vld [vmem:[#allocation6 + $0x78] sm:$0xff]
      %v342 = vadd.f32 %v310, %v326
      %v343 = vadd.f32 %v311, %v327
      %v344 = vadd.f32 %v312, %v328
      %v345 = vadd.f32 %v313, %v329
      %v346 = vadd.f32 %v314, %v330
      %v347 = vadd.f32 %v315, %v331
      %v348 = vadd.f32 %v316, %v332
      %v349 = vadd.f32 %v317, %v333
      %v350 = vadd.f32 %v318, %v334
      %v351 = vadd.f32 %v319, %v335
      %v352 = vadd.f32 %v320, %v336
      %v353 = vadd.f32 %v321, %v337
      %v354 = vadd.f32 %v322, %v338
      %v355 = vadd.f32 %v323, %v339
      %v356 = vadd.f32 %v324, %v340
      %v357 = vadd.f32 %v325, %v341
      %359 = vset.pattern.permute.xlu0 0
      %360 = vperm.xlu0 %359, %v294
      %v361 = vpop.permute.xlu0 %360
      %364 = vset.pattern.permute.xlu0 0
      %365 = vperm.xlu0 %364, %v295
      %v366 = vpop.permute.xlu0 %365
      %369 = vset.pattern.permute.xlu0 0
      %370 = vperm.xlu0 %369, %v296
      %v371 = vpop.permute.xlu0 %370
      %374 = vset.pattern.permute.xlu0 0
      %375 = vperm.xlu0 %374, %v297
      %v376 = vpop.permute.xlu0 %375
      %379 = vset.pattern.permute.xlu0 0
      %380 = vperm.xlu0 %379, %v298
      %v381 = vpop.permute.xlu0 %380
      %384 = vset.pattern.permute.xlu0 0
      %385 = vperm.xlu0 %384, %v299
      %v386 = vpop.permute.xlu0 %385
      %389 = vset.pattern.permute.xlu0 0
      %390 = vperm.xlu0 %389, %v300
      %v391 = vpop.permute.xlu0 %390
      %394 = vset.pattern.permute.xlu0 0
      %395 = vperm.xlu0 %394, %v301
      %v396 = vpop.permute.xlu0 %395
      %399 = vset.pattern.permute.xlu0 0
      %400 = vperm.xlu0 %399, %v302
      %v401 = vpop.permute.xlu0 %400
      %404 = vset.pattern.permute.xlu0 0
      %405 = vperm.xlu0 %404, %v303
      %v406 = vpop.permute.xlu0 %405
      %409 = vset.pattern.permute.xlu0 0
      %410 = vperm.xlu0 %409, %v304
      %v411 = vpop.permute.xlu0 %410
      %414 = vset.pattern.permute.xlu0 0
      %415 = vperm.xlu0 %414, %v305
      %v416 = vpop.permute.xlu0 %415
      %419 = vset.pattern.permute.xlu0 0
      %420 = vperm.xlu0 %419, %v306
      %v421 = vpop.permute.xlu0 %420
      %424 = vset.pattern.permute.xlu0 0
      %425 = vperm.xlu0 %424, %v307
      %v426 = vpop.permute.xlu0 %425
      %429 = vset.pattern.permute.xlu0 0
      %430 = vperm.xlu0 %429, %v308
      %v431 = vpop.permute.xlu0 %430
      %434 = vset.pattern.permute.xlu0 0
      %435 = vperm.xlu0 %434, %v309
      %v436 = vpop.permute.xlu0 %435
      %v438 = vmul.f32 %v361, %v342
      %v439 = vmul.f32 %v366, %v343
      %v440 = vmul.f32 %v371, %v344
      %v441 = vmul.f32 %v376, %v345
      %v442 = vmul.f32 %v381, %v346
      %v443 = vmul.f32 %v386, %v347
      %v444 = vmul.f32 %v391, %v348
      %v445 = vmul.f32 %v396, %v349
      %v446 = vmul.f32 %v401, %v350
      %v447 = vmul.f32 %v406, %v351
      %v448 = vmul.f32 %v411, %v352
      %v449 = vmul.f32 %v416, %v353
      %v450 = vmul.f32 %v421, %v354
      %v451 = vmul.f32 %v426, %v355
      %v452 = vmul.f32 %v431, %v356
      %v453 = vmul.f32 %v436, %v357
      %v454 = vmax.f32 %v438, 0.0
      %v455 = vmax.f32 %v439, 0.0
      %v456 = vmax.f32 %v440, 0.0
      %v457 = vmax.f32 %v441, 0.0
      %v458 = vmax.f32 %v442, 0.0
      %v459 = vmax.f32 %v443, 0.0
      %v460 = vmax.f32 %v444, 0.0
      %v461 = vmax.f32 %v445, 0.0
      %v462 = vmax.f32 %v446, 0.0
      %v463 = vmax.f32 %v447, 0.0
      %v464 = vmax.f32 %v448, 0.0
      %v465 = vmax.f32 %v449, 0.0
      %v466 = vmax.f32 %v450, 0.0
      %v467 = vmax.f32 %v451, 0.0
      %v468 = vmax.f32 %v452, 0.0
      %v469 = vmax.f32 %v453, 0.0
      %v470 = vmul.f32 %v454, %v454
      %v471 = vmul.f32 %v455, %v455
      %v472 = vmul.f32 %v456, %v456
      %v473 = vmul.f32 %v457, %v457
      %v474 = vmul.f32 %v458, %v458
      %v475 = vmul.f32 %v459, %v459
      %v476 = vmul.f32 %v460, %v460
      %v477 = vmul.f32 %v461, %v461
      %v478 = vmul.f32 %v462, %v462
      %v479 = vmul.f32 %v463, %v463
      %v480 = vmul.f32 %v464, %v464
      %v481 = vmul.f32 %v465, %v465
      %v482 = vmul.f32 %v466, %v466
      %v483 = vmul.f32 %v467, %v467
      %v484 = vmul.f32 %v468, %v468
      %v485 = vmul.f32 %v469, %v469
      %486 = vadd.xlane.f32.xlu0 %v470
      %v487 = vpop.xlane.xlu0 %486
      %488 = vadd.xlane.f32.xlu0 %v471
      %v489 = vpop.xlane.xlu0 %488
      %490 = vadd.xlane.f32.xlu0 %v472
      %v491 = vpop.xlane.xlu0 %490
      %492 = vadd.xlane.f32.xlu0 %v473
      %v493 = vpop.xlane.xlu0 %492
      %494 = vadd.xlane.f32.xlu0 %v474
      %v495 = vpop.xlane.xlu0 %494
      %496 = vadd.xlane.f32.xlu0 %v475
      %v497 = vpop.xlane.xlu0 %496
      %498 = vadd.xlane.f32.xlu0 %v476
      %v499 = vpop.xlane.xlu0 %498
      %500 = vadd.xlane.f32.xlu0 %v477
      %v501 = vpop.xlane.xlu0 %500
      %502 = vadd.xlane.f32.xlu0 %v478
      %v503 = vpop.xlane.xlu0 %502
      %504 = vadd.xlane.f32.xlu0 %v479
      %v505 = vpop.xlane.xlu0 %504
      %506 = vadd.xlane.f32.xlu0 %v480
      %v507 = vpop.xlane.xlu0 %506
      %508 = vadd.xlane.f32.xlu0 %v481
      %v509 = vpop.xlane.xlu0 %508
      %510 = vadd.xlane.f32.xlu0 %v482
      %v511 = vpop.xlane.xlu0 %510
      %512 = vadd.xlane.f32.xlu0 %v483
      %v513 = vpop.xlane.xlu0 %512
      %514 = vadd.xlane.f32.xlu0 %v484
      %v515 = vpop.xlane.xlu0 %514
      %516 = vadd.xlane.f32.xlu0 %v485
      %v517 = vpop.xlane.xlu0 %516
      %v518 = vmax.f32 %v487, 1e-24
      %v519 = vmax.f32 %v489, 1e-24
      %v520 = vmax.f32 %v491, 1e-24
      %v521 = vmax.f32 %v493, 1e-24
      %v522 = vmax.f32 %v495, 1e-24
      %v523 = vmax.f32 %v497, 1e-24
      %v524 = vmax.f32 %v499, 1e-24
      %v525 = vmax.f32 %v501, 1e-24
      %v526 = vmax.f32 %v503, 1e-24
      %v527 = vmax.f32 %v505, 1e-24
      %v528 = vmax.f32 %v507, 1e-24
      %v529 = vmax.f32 %v509, 1e-24
      %v530 = vmax.f32 %v511, 1e-24
      %v531 = vmax.f32 %v513, 1e-24
      %v532 = vmax.f32 %v515, 1e-24
      %v533 = vmax.f32 %v517, 1e-24
      %v534 = vrsqrt.pop %v518
      %v535 = vrsqrt.pop %v519
      %v536 = vrsqrt.pop %v520
      %v537 = vrsqrt.pop %v521
      %v538 = vrsqrt.pop %v522
      %v539 = vrsqrt.pop %v523
      %v540 = vrsqrt.pop %v524
      %v541 = vrsqrt.pop %v525
      %v542 = vrsqrt.pop %v526
      %v543 = vrsqrt.pop %v527
      %v544 = vrsqrt.pop %v528
      %v545 = vrsqrt.pop %v529
      %v546 = vrsqrt.pop %v530
      %v547 = vrsqrt.pop %v531
      %v548 = vrsqrt.pop %v532
      %v549 = vrsqrt.pop %v533
      %v550 = vmul.f32 %v454, %v534
      %v551 = vmul.f32 %v455, %v535
      %v552 = vmul.f32 %v456, %v536
      %v553 = vmul.f32 %v457, %v537
      %v554 = vmul.f32 %v458, %v538
      %v555 = vmul.f32 %v459, %v539
      %v556 = vmul.f32 %v460, %v540
      %v557 = vmul.f32 %v461, %v541
      %v558 = vmul.f32 %v462, %v542
      %v559 = vmul.f32 %v463, %v543
      %v560 = vmul.f32 %v464, %v544
      %v561 = vmul.f32 %v465, %v545
      %v562 = vmul.f32 %v466, %v546
      %v563 = vmul.f32 %v467, %v547
      %v564 = vmul.f32 %v468, %v548
      %v565 = vmul.f32 %v469, %v549
      %566 = vst [vmem:[#allocation8] sm:$0xff] %v550
      %567 = vst [vmem:[#allocation8 + $0x8] sm:$0xff] %v551
      %568 = vst [vmem:[#allocation8 + $0x10] sm:$0xff] %v552
      %569 = vst [vmem:[#allocation8 + $0x18] sm:$0xff] %v553
      %570 = vst [vmem:[#allocation8 + $0x20] sm:$0xff] %v554
      %571 = vst [vmem:[#allocation8 + $0x28] sm:$0xff] %v555
      %572 = vst [vmem:[#allocation8 + $0x30] sm:$0xff] %v556
      %573 = vst [vmem:[#allocation8 + $0x38] sm:$0xff] %v557
      %574 = vst [vmem:[#allocation8 + $0x40] sm:$0xff] %v558
      %575 = vst [vmem:[#allocation8 + $0x48] sm:$0xff] %v559
      %576 = vst [vmem:[#allocation8 + $0x50] sm:$0xff] %v560
      %577 = vst [vmem:[#allocation8 + $0x58] sm:$0xff] %v561
      %578 = vst [vmem:[#allocation8 + $0x60] sm:$0xff] %v562
      %579 = vst [vmem:[#allocation8 + $0x68] sm:$0xff] %v563
      %580 = vst [vmem:[#allocation8 + $0x70] sm:$0xff] %v564
      %581 = vst [vmem:[#allocation8 + $0x78] sm:$0xff] %v565
    $region33: #{tpu_custom_call.1} parent=1 // pred_fallthru
      _
    // Predicated region
    $region34: #{tpu_custom_call.1} parent=1 // pred_check
      _
    $region35: #{tpu_custom_call.1} parent=1 // pred_check_branch
      %583 = sbr.rel (0) target = $region37
    $region36: #{tpu_custom_call.1} parent=1 // pred_region
      %s585 = ssub.s32 2048, 2048
      %586 = vsyncadd [#allocation5], %s585
      %s587 = sshll.u32 [#allocation8], 4
      %s588 = int_to_ptr.vmem [resolvable:$true] %s587
      %593 = dma.vmem_to_hbm [thread:$0]  %s588, 2048, %s4, [#allocation5], 128, 128, 8
    $region37: #{tpu_custom_call.1} parent=1 // pred_fallthru
      _
    // Predicated region
    $region38: #{tpu_custom_call.1} parent=1 // pred_check
      _
    $region39: #{tpu_custom_call.1} parent=1 // pred_check_branch
      %595 = sbr.rel (0) target = $region41
    $region40: #{tpu_custom_call.1} parent=1 // pred_region
      %596 = dma.done [#allocation5], 2048
    $region41: #{tpu_custom_call.1} parent=1 // pred_fallthru
      _
    %597 = vsyncpa [#allocation4], 1
    %598 = vsyncpa [#allocation7], 1
    %599 = vsyncpa [#allocation5], 1

</llo_original>
